<compile_context>
chip_gen: v5e
topology: v5e:2x2
jax: 0.10.0
libtpu: 0.0.40
codegen_flags: <defaults>
</compile_context>

<pallas_src>
import jax
import jax.numpy as jnp
from jax.experimental import pallas as pl
from jax.experimental.pallas import tpu as pltpu

IN_FEATURES = 2
OUT_FEATURES = 1


def _round_up(v, m):
    return ((v + m - 1) // m) * m


def _softplus(x):
    # numerically stable softplus: max(x,0) + log1p(exp(-|x|))  (EUP ops)
    return jnp.maximum(x, 0.0) + jnp.log1p(jnp.exp(-jnp.abs(x)))


def _bayesian_linear_kernel(x_ref, w_ref, bias_ref, out_ref, acc_ref):
    """Reparameterized weight sample (elementwise, f32) + MXU matmul + bias add.

    Per grid step (i over batch tiles, j over out-feature tiles, k over contraction):
      x_ref    (bm, bk)
      w_ref    (3, bk, bn)   planes = [weight_mu^T, weight_rho^T, eps_w]  (already K,N)
      bias_ref (8, bn)       rows 0..2 = [bias_mu, bias_rho, eps_b], rest zero padding
      out_ref  (bm, bn)      acc_ref (bm, bn) f32 scratch
    """
    k = pl.program_id(2)

    @pl.when(k == 0)
    def _init():
        acc_ref[...] = jnp.zeros_like(acc_ref)

    # weight sample in (K, N) layout — no transpose on the matmul critical path
    wmu = w_ref[0].astype(jnp.float32)
    wrho = w_ref[1].astype(jnp.float32)
    weps = w_ref[2].astype(jnp.float32)
    weight = wmu + _softplus(wrho) * weps

    acc_ref[...] += jnp.dot(x_ref[...].astype(jnp.float32), weight,
                            preferred_element_type=jnp.float32)

    @pl.when(k == pl.num_programs(2) - 1)
    def _finalize():
        b = bias_ref[...].astype(jnp.float32)                  # (8, bn)
        bias = b[0:1, :] + _softplus(b[1:2, :]) * b[2:3, :]    # (1, bn)
        out_ref[...] = (acc_ref[...] + bias).astype(out_ref.dtype)


def bayesian_linear_forward(x, weight_mu, weight_rho, bias_mu, bias_rho, key):
    """Returns (output, (weight_mu, weight_sigma), (bias_mu, bias_sigma))."""
    B, K = x.shape
    N = weight_mu.shape[0]
    out_dtype = x.dtype

    # torch.randn_like(...) equivalents, drawn directly in the transposed (K, N)
    # layout so no transpose of eps is ever needed.
    k_w, k_b = jax.random.split(key)
    weight_eps_t = jax.random.normal(k_w, (K, N), dtype=weight_mu.dtype)
    bias_eps = jax.random.normal(k_b, (N,), dtype=bias_mu.dtype)

    # ---- tile sizes (lane-dense, VMEM-budgeted: fits v7x 32 MiB scoped default) ----
    bm = min(128, _round_up(B, 8))          # f32 sublane multiple
    bn = 256 if N > 128 else 128            # 256-aligned for v6e/v7x MXU at scale
    bk = 512 if K > 256 else 128
    Bp, Kp, Np = _round_up(B, bm), _round_up(K, bk), _round_up(N, bn)

    def pad_to(a, shape):
        return jnp.pad(a, [(0, t - s) for s, t in zip(a.shape, shape)])

    # Zero padding is safe: padded K columns of x are zero, so padded weight rows
    # contribute nothing; padded N columns / B rows are sliced off below.
    x_p = pad_to(x, (Bp, Kp))
    # Single stacked weight operand: (3, Kp, Np) = [mu^T, rho^T, eps] — one DMA/step.
    w_pack = pad_to(jnp.stack([weight_mu.T, weight_rho.T, weight_eps_t], axis=0),
                    (3, Kp, Np))
    # Packed bias slab, padded to 8 sublanes for a clean (8, 128) tile.
    bias_pack = pad_to(jnp.stack([bias_mu, bias_rho, bias_eps], axis=0), (8, Np))

    grid = (Bp // bm, Np // bn, Kp // bk)

    out_p = pl.pallas_call(
        _bayesian_linear_kernel,
        out_shape=jax.ShapeDtypeStruct((Bp, Np), out_dtype),
        grid_spec=pltpu.PrefetchScalarGridSpec(
            num_scalar_prefetch=0,
            grid=grid,
            in_specs=[
                pl.BlockSpec((bm, bk), lambda i, j, k: (i, k)),       # x
                pl.BlockSpec((3, bk, bn), lambda i, j, k: (0, k, j)),  # [mu^T,rho^T,eps]
                pl.BlockSpec((8, bn), lambda i, j, k: (0, j)),         # packed bias
            ],
            out_specs=pl.BlockSpec((bm, bn), lambda i, j, k: (i, j)),
            scratch_shapes=[pltpu.VMEM((bm, bn), jnp.float32)],
        ),
        compiler_params=pltpu.CompilerParams(
            dimension_semantics=("parallel", "parallel", "arbitrary")),
    )(x_p, w_pack, bias_pack)

    out = out_p[:B, :N]

    # Normal(mu, sigma) parameters of the module API; recomputed here (cheap fused
    # XLA elementwise) instead of paying a full (N, K) HBM writeback in the kernel.
    weight_sigma = jax.nn.softplus(weight_rho)
    bias_sigma = jax.nn.softplus(bias_rho)
    return out, (weight_mu, weight_sigma), (bias_mu, bias_sigma)


if __name__ == "__main__":
    root = jax.random.PRNGKey(0)
    k_x, k_wmu, k_wrho, k_bmu, k_brho, k_fwd = jax.random.split(root, 6)

    batch = 8
    x = jax.random.normal(k_x, (batch, IN_FEATURES), dtype=jnp.float32)

    # deterministic parameter init (matches torch.randn shapes)
    weight_mu = jax.random.normal(k_wmu, (OUT_FEATURES, IN_FEATURES), jnp.float32)
    weight_rho = jax.random.normal(k_wrho, (OUT_FEATURES, IN_FEATURES), jnp.float32)
    bias_mu = jax.random.normal(k_bmu, (OUT_FEATURES,), jnp.float32)
    bias_rho = jax.random.normal(k_brho, (OUT_FEATURES,), jnp.float32)

    out, (w_mu, w_sig), (b_mu, b_sig) = bayesian_linear_forward(
        x, weight_mu, weight_rho, bias_mu, bias_rho, k_fwd)
    jax.block_until_ready((out, w_sig, b_sig))

    # pure-JAX reference with identical eps draws (same key split as the wrapper)
    k_w, k_b = jax.random.split(k_fwd)
    weps_t = jax.random.normal(k_w, (IN_FEATURES, OUT_FEATURES), jnp.float32)
    beps = jax.random.normal(k_b, (OUT_FEATURES,), jnp.float32)
    w_t_ref = weight_mu.T + jax.nn.softplus(weight_rho).T * weps_t        # (K, N)
    b_ref = bias_mu + jax.nn.softplus(bias_rho) * beps
    out_ref = x @ w_t_ref + b_ref

    assert out.shape == (batch, OUT_FEATURES)
    assert jnp.allclose(out, out_ref, atol=1e-5), "output mismatch vs reference"
    assert jnp.allclose(w_sig, jax.nn.softplus(weight_rho), atol=1e-6)
    assert jnp.allclose(b_sig, jax.nn.softplus(bias_rho), atol=1e-6)

    print("KERNEL_OK")
</pallas_src>

<mosaic_0001>
module attributes {stable_mosaic.version = 11 : i64} {
  func.func @_bayesian_linear_kernel(%arg0: i32, %arg1: i32, %arg2: i32, %arg3: memref<8x128xf32, #tpu.memory_space<vmem>>, %arg4: memref<3x128x128xf32, #tpu.memory_space<vmem>>, %arg5: memref<8x128xf32, #tpu.memory_space<vmem>>, %arg6: memref<8x128xf32, #tpu.memory_space<vmem>>, %arg7: memref<8x128xf32, #tpu.memory_space<vmem>>) attributes {dimension_semantics = [#tpu.dimension_semantics<parallel>, #tpu.dimension_semantics<parallel>, #tpu.dimension_semantics<arbitrary>], iteration_bounds = array<i64: 1, 1, 1>, scalar_prefetch = 0 : i64, scratch_operands = 1 : i64, tpu.core_type = #tpu.core_type<tc>, window_params = [{transform_indices = @transform_0, window_bounds = array<i64: 8, 128>}, {transform_indices = @transform_1, window_bounds = array<i64: 3, 128, 128>}, {transform_indices = @transform_2, window_bounds = array<i64: 8, 128>}, {transform_indices = @transform_3, window_bounds = array<i64: 8, 128>}]} {
    %c0_i32 = arith.constant 0 : i32
    %0 = arith.cmpi eq, %arg2, %c0_i32 : i32
    %1 = arith.extui %0 : i1 to i32
    %c0_i32_0 = arith.constant 0 : i32
    %2 = arith.cmpi ne, %1, %c0_i32_0 : i32
    scf.if %2 {
      %cst_17 = arith.constant 0.000000e+00 : f32
      %27 = vector.broadcast %cst_17 : f32 to vector<8x128xf32>
      %c0_18 = arith.constant 0 : index
      %c0_19 = arith.constant 0 : index
      %28 = vector.load %arg7[%c0_18, %c0_19] : memref<8x128xf32, #tpu.memory_space<vmem>>, vector<8x128xf32>
      tpu.vector_store %arg7[%c0_18, %c0_19], %27 {strides = array<i32>} : memref<8x128xf32, #tpu.memory_space<vmem>>, vector<8x128xf32>,
    } else {
    }
    %c0 = arith.constant 0 : index
    %c0_1 = arith.constant 0 : index
    %c0_2 = arith.constant 0 : index
    %3 = vector.load %arg4[%c0, %c0_1, %c0_2] : memref<3x128x128xf32, #tpu.memory_space<vmem>>, vector<1x128x128xf32>
    %4 = vector.shape_cast %3 : vector<1x128x128xf32> to vector<128x128xf32>
    %c1 = arith.constant 1 : index
    %c0_3 = arith.constant 0 : index
    %c0_4 = arith.constant 0 : index
    %5 = vector.load %arg4[%c1, %c0_3, %c0_4] : memref<3x128x128xf32, #tpu.memory_space<vmem>>, vector<1x128x128xf32>
    %6 = vector.shape_cast %5 : vector<1x128x128xf32> to vector<128x128xf32>
    %c2 = arith.constant 2 : index
    %c0_5 = arith.constant 0 : index
    %c0_6 = arith.constant 0 : index
    %7 = vector.load %arg4[%c2, %c0_5, %c0_6] : memref<3x128x128xf32, #tpu.memory_space<vmem>>, vector<1x128x128xf32>
    %8 = vector.shape_cast %7 : vector<1x128x128xf32> to vector<128x128xf32>
    %cst = arith.constant 0.000000e+00 : f32
    %9 = vector.broadcast %cst : f32 to vector<128x128xf32>
    %10 = arith.maximumf %6, %9 : vector<128x128xf32>
    %11 = math.absf %6 : vector<128x128xf32>
    %cst_7 = arith.constant 0.000000e+00 : f32
    %12 = vector.broadcast %cst_7 : f32 to vector<128x128xf32>
    %13 = arith.subf %12, %11 : vector<128x128xf32>
    %14 = math.exp %13 : vector<128x128xf32>
    %15 = math.log1p %14 : vector<128x128xf32>
    %16 = arith.addf %10, %15 : vector<128x128xf32>
    %17 = arith.mulf %16, %8 : vector<128x128xf32>
    %18 = arith.addf %4, %17 : vector<128x128xf32>
    %c0_8 = arith.constant 0 : index
    %c0_9 = arith.constant 0 : index
    %19 = vector.load %arg7[%c0_8, %c0_9] : memref<8x128xf32, #tpu.memory_space<vmem>>, vector<8x128xf32>
    %c0_10 = arith.constant 0 : index
    %c0_11 = arith.constant 0 : index
    %20 = vector.load %arg3[%c0_10, %c0_11] : memref<8x128xf32, #tpu.memory_space<vmem>>, vector<8x128xf32>
    %cst_12 = arith.constant dense<0.000000e+00> : vector<8x128xf32>
    %21 = tpu.matmul %20, %18, %cst_12 {dimension_numbers = #tpu.dot_dimension_numbers<[1], [0], [0], [1], [0, 0, 1, 1], [], []>} : vector<8x128xf32>, vector<128x128xf32>, vector<8x128xf32> -> vector<8x128xf32>
    %22 = arith.addf %19, %21 : vector<8x128xf32>
    %c0_13 = arith.constant 0 : index
    %c0_14 = arith.constant 0 : index
    %23 = vector.load %arg7[%c0_13, %c0_14] : memref<8x128xf32, #tpu.memory_space<vmem>>, vector<8x128xf32>
    tpu.vector_store %arg7[%c0_13, %c0_14], %22 {strides = array<i32>} : memref<8x128xf32, #tpu.memory_space<vmem>>, vector<8x128xf32>,
    %c0_i32_15 = arith.constant 0 : i32
    %24 = arith.cmpi eq, %arg2, %c0_i32_15 : i32
    %25 = arith.extui %24 : i1 to i32
    %c0_i32_16 = arith.constant 0 : i32
    %26 = arith.cmpi ne, %25, %c0_i32_16 : i32
    scf.if %26 {
      %c0_17 = arith.constant 0 : index
      %c0_18 = arith.constant 0 : index
      %27 = vector.load %arg5[%c0_17, %c0_18] : memref<8x128xf32, #tpu.memory_space<vmem>>, vector<8x128xf32>
      %28 = vector.extract_strided_slice %27 {offsets = [0, 0], sizes = [1, 128], strides = [1, 1]} : vector<8x128xf32> to vector<1x128xf32>
      %29 = vector.extract_strided_slice %27 {offsets = [1, 0], sizes = [1, 128], strides = [1, 1]} : vector<8x128xf32> to vector<1x128xf32>
      %cst_19 = arith.constant 0.000000e+00 : f32
      %30 = vector.broadcast %cst_19 : f32 to vector<1x128xf32>
      %31 = arith.maximumf %29, %30 : vector<1x128xf32>
      %32 = math.absf %29 : vector<1x128xf32>
      %cst_20 = arith.constant 0.000000e+00 : f32
      %33 = vector.broadcast %cst_20 : f32 to vector<1x128xf32>
      %34 = arith.subf %33, %32 : vector<1x128xf32>
      %35 = math.exp %34 : vector<1x128xf32>
      %36 = math.log1p %35 : vector<1x128xf32>
      %37 = arith.addf %31, %36 : vector<1x128xf32>
      %38 = vector.extract_strided_slice %27 {offsets = [2, 0], sizes = [1, 128], strides = [1, 1]} : vector<8x128xf32> to vector<1x128xf32>
      %39 = arith.mulf %37, %38 : vector<1x128xf32>
      %40 = arith.addf %28, %39 : vector<1x128xf32>
      %c0_21 = arith.constant 0 : index
      %c0_22 = arith.constant 0 : index
      %41 = vector.load %arg7[%c0_21, %c0_22] : memref<8x128xf32, #tpu.memory_space<vmem>>, vector<8x128xf32>
      %42 = vector.broadcast %40 : vector<1x128xf32> to vector<8x128xf32>
      %43 = arith.addf %41, %42 : vector<8x128xf32>
      %c0_23 = arith.constant 0 : index
      %c0_24 = arith.constant 0 : index
      %44 = vector.load %arg6[%c0_23, %c0_24] : memref<8x128xf32, #tpu.memory_space<vmem>>, vector<8x128xf32>
      tpu.vector_store %arg6[%c0_23, %c0_24], %43 {strides = array<i32>} : memref<8x128xf32, #tpu.memory_space<vmem>>, vector<8x128xf32>,
    } else {
    }
    return
  }
  func.func @transform_0(%arg0: i32, %arg1: i32, %arg2: i32) -> (i32, i32) {
    %c0_i32 = arith.constant 0 : i32
    return %arg0, %arg2 : i32, i32
  }
  func.func @transform_1(%arg0: i32, %arg1: i32, %arg2: i32) -> (i32, i32, i32) {
    %c0_i32 = arith.constant 0 : i32
    %c0_i32_0 = arith.constant 0 : i32
    return %c0_i32, %arg2, %arg1 : i32, i32, i32
  }
  func.func @transform_2(%arg0: i32, %arg1: i32, %arg2: i32) -> (i32, i32) {
    %c0_i32 = arith.constant 0 : i32
    %c0_i32_0 = arith.constant 0 : i32
    return %c0_i32, %arg1 : i32, i32
  }
  func.func @transform_3(%arg0: i32, %arg1: i32, %arg2: i32) -> (i32, i32) {
    %c0_i32 = arith.constant 0 : i32
    return %arg0, %arg1 : i32, i32
  }
}

</mosaic_0001>

<llo_original>
// kernel: tpu_custom_call.1
$region0: #{tpu_custom_call.1}
  #allocation0 [shape = 'u32[]', space=smem, size = 0x4, offset = 0x4, fixed_abs, tag = 'smem constant byte address 0x4 - core index']
  #allocation1 [shape = 'u32[72,128]{1,0:T(1,128)}', space=vmem, size = 0x9000, scoped, tag = 'internal scratch']
  #allocation2 [shape = 'f32[8,128]{1,0:T(8,128)}', space=vmem, size = 0x1000, scoped, tag = 'scratch operand']
  %s0 = inlined_call_operand.hbm [shape: f32[8,128], index: 0, kind: input, shape index: {}]
  %s1 = inlined_call_operand.hbm [shape: f32[3,128,128], index: 1, kind: input, shape index: {}]
  %s2 = inlined_call_operand.hbm [shape: f32[8,128], index: 2, kind: input, shape index: {}]
  %s3 = inlined_call_operand.hbm [shape: f32[8,128], index: 3, kind: output, shape index: {}]
  %s4 = sld [smem:[#allocation0]]
  $region42: #{tpu_custom_call.1} parent=0
    _
  %s6 = ssub.s32 1, %s4
  %s7 = scalar_select 0, %s6, %s4
  $region1: #{tpu_custom_call.1} parent=0
    #allocation3 [shape = 'u8[4096]{0}', space=vmem, size = 0x1000, scoped, tag = 'input window, operand 0, single buffered']
    #allocation4 [shape = 's32[1]{0}', space=sflag, size = 0x4, scoped, tag = 'scoped memory for tpu_custom_call.1']
    #allocation5 [shape = 's32[1]{0}', space=sflag, size = 0x4, scoped, tag = 'scoped memory for tpu_custom_call.1']
    #allocation6 [shape = 'u8[196608]{0}', space=vmem, size = 0x30000, scoped, tag = 'input window, operand 1, single buffered']
    #allocation7 [shape = 's32[1]{0}', space=sflag, size = 0x4, scoped, tag = 'scoped memory for tpu_custom_call.1']
    #allocation8 [shape = 'u8[4096]{0}', space=vmem, size = 0x1000, scoped, tag = 'input window, operand 2, single buffered']
    #allocation9 [shape = 'u8[4096]{0}', space=vmem, size = 0x1000, scoped, tag = 'output window, operand 0, single buffered']
    %8 = vsyncpa [#allocation4], 0
    %9 = vsyncpa [#allocation7], 0
    %10 = vsyncpa [#allocation5], 0
    // Predicated region
    $region2: #{tpu_custom_call.1} parent=1 // pred_check
      _
    $region3: #{tpu_custom_call.1} parent=1 // pred_check_branch
      %12 = sbr.rel (0) target = $region5
    $region4: #{tpu_custom_call.1} parent=1 // pred_region
      %14 = vsyncadd [#allocation4], 0
      %s16 = sshll.u32 %s0, 4
      %s17 = int_to_ptr.hbm [resolvable:$true] %s16
      %s18 = sshll.u32 [#allocation3], 4
      %s19 = int_to_ptr.vmem [resolvable:$true] %s18
      %21 = dma.hbm_to_vmem [thread:$0]  %s17, 128, %s19, [#allocation4]
    $region5: #{tpu_custom_call.1} parent=1 // pred_fallthru
      _
    // Predicated region
    $region6: #{tpu_custom_call.1} parent=1 // pred_check
      _
    $region7: #{tpu_custom_call.1} parent=1 // pred_check_branch
      %23 = sbr.rel (0) target = $region9
    $region8: #{tpu_custom_call.1} parent=1 // pred_region
      %25 = vsyncadd [#allocation7], 0
      %s26 = sshll.u32 %s1, 4
      %s27 = int_to_ptr.hbm [resolvable:$true] %s26
      %s28 = sshll.u32 [#allocation6], 4
      %s29 = int_to_ptr.vmem [resolvable:$true] %s28
      %34 = dma.hbm_to_vmem [thread:$0]  %s27, 6144, %s29, [#allocation7], 128, 128, 8
    $region9: #{tpu_custom_call.1} parent=1 // pred_fallthru
      _
    // Predicated region
    $region10: #{tpu_custom_call.1} parent=1 // pred_check
      _
    $region11: #{tpu_custom_call.1} parent=1 // pred_check_branch
      %36 = sbr.rel (0) target = $region13
    $region12: #{tpu_custom_call.1} parent=1 // pred_region
      %38 = vsyncadd [#allocation7], 0
      %s40 = sshll.u32 %s2, 4
      %s41 = int_to_ptr.hbm [resolvable:$true] %s40
      %s42 = sshll.u32 [#allocation8], 4
      %s43 = int_to_ptr.vmem [resolvable:$true] %s42
      %45 = dma.hbm_to_vmem [thread:$0]  %s41, 128, %s43, [#allocation7]
    $region13: #{tpu_custom_call.1} parent=1 // pred_fallthru
      _
    // Predicated region
    $region14: #{tpu_custom_call.1} parent=1 // pred_check
      _
    $region15: #{tpu_custom_call.1} parent=1 // pred_check_branch
      %47 = sbr.rel (0) target = $region17
    $region16: #{tpu_custom_call.1} parent=1 // pred_region
      %49 = dma.done [#allocation4], 128
    $region17: #{tpu_custom_call.1} parent=1 // pred_fallthru
      _
    // Predicated region
    $region18: #{tpu_custom_call.1} parent=1 // pred_check
      _
    $region19: #{tpu_custom_call.1} parent=1 // pred_check_branch
      %51 = sbr.rel (0) target = $region21
    $region20: #{tpu_custom_call.1} parent=1 // pred_region
      %53 = dma.done [#allocation7], 6144
    $region21: #{tpu_custom_call.1} parent=1 // pred_fallthru
      _
    // Predicated region
    $region22: #{tpu_custom_call.1} parent=1 // pred_check
      _
    $region23: #{tpu_custom_call.1} parent=1 // pred_check_branch
      %55 = sbr.rel (0) target = $region25
    $region24: #{tpu_custom_call.1} parent=1 // pred_region
      %57 = dma.done [#allocation7], 128
    $region25: #{tpu_custom_call.1} parent=1 // pred_fallthru
      _
    %p58 = scmp.eq.s32.totalorder 0, 0
    // Predicated region
    $region26: #{tpu_custom_call.1} parent=1 // pred_check
      %p59 = pneg %p58
    $region27: #{tpu_custom_call.1} parent=1 // pred_check_branch
      %61 = sbr.rel (%p59) target = $region29
    $region28: #{tpu_custom_call.1} parent=1 // pred_region
      %62 = vst [vmem:[#allocation2] sm:$0xff] 0.0
    $region29: #{tpu_custom_call.1} parent=1 // pred_fallthru
      _
    %v63 = vld [vmem:[#allocation6] sm:$0xff]
    %v64 = vld [vmem:[#allocation6 + $0x8] sm:$0xff]
    %v65 = vld [vmem:[#allocation6 + $0x10] sm:$0xff]
    %v66 = vld [vmem:[#allocation6 + $0x18] sm:$0xff]
    %v67 = vld [vmem:[#allocation6 + $0x20] sm:$0xff]
    %v68 = vld [vmem:[#allocation6 + $0x28] sm:$0xff]
    %v69 = vld [vmem:[#allocation6 + $0x30] sm:$0xff]
    %v70 = vld [vmem:[#allocation6 + $0x38] sm:$0xff]
    %v71 = vld [vmem:[#allocation6 + $0x40] sm:$0xff]
    %v72 = vld [vmem:[#allocation6 + $0x48] sm:$0xff]
    %v73 = vld [vmem:[#allocation6 + $0x50] sm:$0xff]
    %v74 = vld [vmem:[#allocation6 + $0x58] sm:$0xff]
    %v75 = vld [vmem:[#allocation6 + $0x60] sm:$0xff]
    %v76 = vld [vmem:[#allocation6 + $0x68] sm:$0xff]
    %v77 = vld [vmem:[#allocation6 + $0x70] sm:$0xff]
    %v78 = vld [vmem:[#allocation6 + $0x78] sm:$0xff]
    %s79 = scalar_lea.vmem [#allocation6], 128
    %v80 = vld [vmem:[%s79] sm:$0xff]
    %v81 = vld [vmem:[%s79 + $0x8] sm:$0xff]
    %v82 = vld [vmem:[%s79 + $0x10] sm:$0xff]
    %v83 = vld [vmem:[%s79 + $0x18] sm:$0xff]
    %v84 = vld [vmem:[%s79 + $0x20] sm:$0xff]
    %v85 = vld [vmem:[%s79 + $0x28] sm:$0xff]
    %v86 = vld [vmem:[%s79 + $0x30] sm:$0xff]
    %v87 = vld [vmem:[%s79 + $0x38] sm:$0xff]
    %v88 = vld [vmem:[%s79 + $0x40] sm:$0xff]
    %v89 = vld [vmem:[%s79 + $0x48] sm:$0xff]
    %v90 = vld [vmem:[%s79 + $0x50] sm:$0xff]
    %v91 = vld [vmem:[%s79 + $0x58] sm:$0xff]
    %v92 = vld [vmem:[%s79 + $0x60] sm:$0xff]
    %v93 = vld [vmem:[%s79 + $0x68] sm:$0xff]
    %v94 = vld [vmem:[%s79 + $0x70] sm:$0xff]
    %v95 = vld [vmem:[%s79 + $0x78] sm:$0xff]
    %s96 = scalar_lea.vmem [#allocation6], 256
    %v97 = vld [vmem:[%s96] sm:$0xff]
    %v98 = vld [vmem:[%s96 + $0x8] sm:$0xff]
    %v99 = vld [vmem:[%s96 + $0x10] sm:$0xff]
    %v100 = vld [vmem:[%s96 + $0x18] sm:$0xff]
    %v101 = vld [vmem:[%s96 + $0x20] sm:$0xff]
    %v102 = vld [vmem:[%s96 + $0x28] sm:$0xff]
    %v103 = vld [vmem:[%s96 + $0x30] sm:$0xff]
    %v104 = vld [vmem:[%s96 + $0x38] sm:$0xff]
    %v105 = vld [vmem:[%s96 + $0x40] sm:$0xff]
    %v106 = vld [vmem:[%s96 + $0x48] sm:$0xff]
    %v107 = vld [vmem:[%s96 + $0x50] sm:$0xff]
    %v108 = vld [vmem:[%s96 + $0x58] sm:$0xff]
    %v109 = vld [vmem:[%s96 + $0x60] sm:$0xff]
    %v110 = vld [vmem:[%s96 + $0x68] sm:$0xff]
    %v111 = vld [vmem:[%s96 + $0x70] sm:$0xff]
    %v112 = vld [vmem:[%s96 + $0x78] sm:$0xff]
    %v113 = vmax.f32 %v80, 0.0
    %v114 = vmax.f32 %v81, 0.0
    %v115 = vmax.f32 %v82, 0.0
    %v116 = vmax.f32 %v83, 0.0
    %v117 = vmax.f32 %v84, 0.0
    %v118 = vmax.f32 %v85, 0.0
    %v119 = vmax.f32 %v86, 0.0
    %v120 = vmax.f32 %v87, 0.0
    %v121 = vmax.f32 %v88, 0.0
    %v122 = vmax.f32 %v89, 0.0
    %v123 = vmax.f32 %v90, 0.0
    %v124 = vmax.f32 %v91, 0.0
    %v125 = vmax.f32 %v92, 0.0
    %v126 = vmax.f32 %v93, 0.0
    %v127 = vmax.f32 %v94, 0.0
    %v128 = vmax.f32 %v95, 0.0
    %v129 = vand.u32 2147483647, %v80
    %v130 = vand.u32 2147483647, %v81
    %v131 = vand.u32 2147483647, %v82
    %v132 = vand.u32 2147483647, %v83
    %v133 = vand.u32 2147483647, %v84
    %v134 = vand.u32 2147483647, %v85
    %v135 = vand.u32 2147483647, %v86
    %v136 = vand.u32 2147483647, %v87
    %v137 = vand.u32 2147483647, %v88
    %v138 = vand.u32 2147483647, %v89
    %v139 = vand.u32 2147483647, %v90
    %v140 = vand.u32 2147483647, %v91
    %v141 = vand.u32 2147483647, %v92
    %v142 = vand.u32 2147483647, %v93
    %v143 = vand.u32 2147483647, %v94
    %v144 = vand.u32 2147483647, %v95
    %v145 = vsub.f32 0.0, %v129
    %v146 = vsub.f32 0.0, %v130
    %v147 = vsub.f32 0.0, %v131
    %v148 = vsub.f32 0.0, %v132
    %v149 = vsub.f32 0.0, %v133
    %v150 = vsub.f32 0.0, %v134
    %v151 = vsub.f32 0.0, %v135
    %v152 = vsub.f32 0.0, %v136
    %v153 = vsub.f32 0.0, %v137
    %v154 = vsub.f32 0.0, %v138
    %v155 = vsub.f32 0.0, %v139
    %v156 = vsub.f32 0.0, %v140
    %v157 = vsub.f32 0.0, %v141
    %v158 = vsub.f32 0.0, %v142
    %v159 = vsub.f32 0.0, %v143
    %v160 = vsub.f32 0.0, %v144
    %v161 = vmul.f32 %v145, 1.442695
    %v162 = vpow.pop %v161
    %v163 = vmul.f32 %v146, 1.442695
    %v164 = vpow.pop %v163
    %v165 = vmul.f32 %v147, 1.442695
    %v166 = vpow.pop %v165
    %v167 = vmul.f32 %v148, 1.442695
    %v168 = vpow.pop %v167
    %v169 = vmul.f32 %v149, 1.442695
    %v170 = vpow.pop %v169
    %v171 = vmul.f32 %v150, 1.442695
    %v172 = vpow.pop %v171
    %v173 = vmul.f32 %v151, 1.442695
    %v174 = vpow.pop %v173
    %v175 = vmul.f32 %v152, 1.442695
    %v176 = vpow.pop %v175
    %v177 = vmul.f32 %v153, 1.442695
    %v178 = vpow.pop %v177
    %v179 = vmul.f32 %v154, 1.442695
    %v180 = vpow.pop %v179
    %v181 = vmul.f32 %v155, 1.442695
    %v182 = vpow.pop %v181
    %v183 = vmul.f32 %v156, 1.442695
    %v184 = vpow.pop %v183
    %v185 = vmul.f32 %v157, 1.442695
    %v186 = vpow.pop %v185
    %v187 = vmul.f32 %v158, 1.442695
    %v188 = vpow.pop %v187
    %v189 = vmul.f32 %v159, 1.442695
    %v190 = vpow.pop %v189
    %v191 = vmul.f32 %v160, 1.442695
    %v192 = vpow.pop %v191
    %v193 = vadd.f32 %v162, 1.0
    %v194 = vlog2.pop %v193
    %v195 = vmul.f32 %v194, 0.6931472
    %v196 = vmul.f32 -0.5, %v162
    %v197 = vadd.f32 %v196, 1.0
    %v198 = vmul.f32 %v197, %v162
    %v199 = vand.u32 2147483647, %v162
    %vm200 = vcmp.lt.f32.partialorder %v199, 0.0004427343
    %v201 = vsel %vm200, %v198, %v195
    %v202 = vadd.f32 %v164, 1.0
    %v203 = vlog2.pop %v202
    %v204 = vmul.f32 %v203, 0.6931472
    %v205 = vmul.f32 -0.5, %v164
    %v206 = vadd.f32 %v205, 1.0
    %v207 = vmul.f32 %v206, %v164
    %v208 = vand.u32 2147483647, %v164
    %vm209 = vcmp.lt.f32.partialorder %v208, 0.0004427343
    %v210 = vsel %vm209, %v207, %v204
    %v211 = vadd.f32 %v166, 1.0
    %v212 = vlog2.pop %v211
    %v213 = vmul.f32 %v212, 0.6931472
    %v214 = vmul.f32 -0.5, %v166
    %v215 = vadd.f32 %v214, 1.0
    %v216 = vmul.f32 %v215, %v166
    %v217 = vand.u32 2147483647, %v166
    %vm218 = vcmp.lt.f32.partialorder %v217, 0.0004427343
    %v219 = vsel %vm218, %v216, %v213
    %v220 = vadd.f32 %v168, 1.0
    %v221 = vlog2.pop %v220
    %v222 = vmul.f32 %v221, 0.6931472
    %v223 = vmul.f32 -0.5, %v168
    %v224 = vadd.f32 %v223, 1.0
    %v225 = vmul.f32 %v224, %v168
    %v226 = vand.u32 2147483647, %v168
    %vm227 = vcmp.lt.f32.partialorder %v226, 0.0004427343
    %v228 = vsel %vm227, %v225, %v222
    %v229 = vadd.f32 %v170, 1.0
    %v230 = vlog2.pop %v229
    %v231 = vmul.f32 %v230, 0.6931472
    %v232 = vmul.f32 -0.5, %v170
    %v233 = vadd.f32 %v232, 1.0
    %v234 = vmul.f32 %v233, %v170
    %v235 = vand.u32 2147483647, %v170
    %vm236 = vcmp.lt.f32.partialorder %v235, 0.0004427343
    %v237 = vsel %vm236, %v234, %v231
    %v238 = vadd.f32 %v172, 1.0
    %v239 = vlog2.pop %v238
    %v240 = vmul.f32 %v239, 0.6931472
    %v241 = vmul.f32 -0.5, %v172
    %v242 = vadd.f32 %v241, 1.0
    %v243 = vmul.f32 %v242, %v172
    %v244 = vand.u32 2147483647, %v172
    %vm245 = vcmp.lt.f32.partialorder %v244, 0.0004427343
    %v246 = vsel %vm245, %v243, %v240
    %v247 = vadd.f32 %v174, 1.0
    %v248 = vlog2.pop %v247
    %v249 = vmul.f32 %v248, 0.6931472
    %v250 = vmul.f32 -0.5, %v174
    %v251 = vadd.f32 %v250, 1.0
    %v252 = vmul.f32 %v251, %v174
    %v253 = vand.u32 2147483647, %v174
    %vm254 = vcmp.lt.f32.partialorder %v253, 0.0004427343
    %v255 = vsel %vm254, %v252, %v249
    %v256 = vadd.f32 %v176, 1.0
    %v257 = vlog2.pop %v256
    %v258 = vmul.f32 %v257, 0.6931472
    %v259 = vmul.f32 -0.5, %v176
    %v260 = vadd.f32 %v259, 1.0
    %v261 = vmul.f32 %v260, %v176
    %v262 = vand.u32 2147483647, %v176
    %vm263 = vcmp.lt.f32.partialorder %v262, 0.0004427343
    %v264 = vsel %vm263, %v261, %v258
    %v265 = vadd.f32 %v178, 1.0
    %v266 = vlog2.pop %v265
    %v267 = vmul.f32 %v266, 0.6931472
    %v268 = vmul.f32 -0.5, %v178
    %v269 = vadd.f32 %v268, 1.0
    %v270 = vmul.f32 %v269, %v178
    %v271 = vand.u32 2147483647, %v178
    %vm272 = vcmp.lt.f32.partialorder %v271, 0.0004427343
    %v273 = vsel %vm272, %v270, %v267
    %v274 = vadd.f32 %v180, 1.0
    %v275 = vlog2.pop %v274
    %v276 = vmul.f32 %v275, 0.6931472
    %v277 = vmul.f32 -0.5, %v180
    %v278 = vadd.f32 %v277, 1.0
    %v279 = vmul.f32 %v278, %v180
    %v280 = vand.u32 2147483647, %v180
    %vm281 = vcmp.lt.f32.partialorder %v280, 0.0004427343
    %v282 = vsel %vm281, %v279, %v276
    %v283 = vadd.f32 %v182, 1.0
    %v284 = vlog2.pop %v283
    %v285 = vmul.f32 %v284, 0.6931472
    %v286 = vmul.f32 -0.5, %v182
    %v287 = vadd.f32 %v286, 1.0
    %v288 = vmul.f32 %v287, %v182
    %v289 = vand.u32 2147483647, %v182
    %vm290 = vcmp.lt.f32.partialorder %v289, 0.0004427343
    %v291 = vsel %vm290, %v288, %v285
    %v292 = vadd.f32 %v184, 1.0
    %v293 = vlog2.pop %v292
    %v294 = vmul.f32 %v293, 0.6931472
    %v295 = vmul.f32 -0.5, %v184
    %v296 = vadd.f32 %v295, 1.0
    %v297 = vmul.f32 %v296, %v184
    %v298 = vand.u32 2147483647, %v184
    %vm299 = vcmp.lt.f32.partialorder %v298, 0.0004427343
    %v300 = vsel %vm299, %v297, %v294
    %v301 = vadd.f32 %v186, 1.0
    %v302 = vlog2.pop %v301
    %v303 = vmul.f32 %v302, 0.6931472
    %v304 = vmul.f32 -0.5, %v186
    %v305 = vadd.f32 %v304, 1.0
    %v306 = vmul.f32 %v305, %v186
    %v307 = vand.u32 2147483647, %v186
    %vm308 = vcmp.lt.f32.partialorder %v307, 0.0004427343
    %v309 = vsel %vm308, %v306, %v303
    %v310 = vadd.f32 %v188, 1.0
    %v311 = vlog2.pop %v310
    %v312 = vmul.f32 %v311, 0.6931472
    %v313 = vmul.f32 -0.5, %v188
    %v314 = vadd.f32 %v313, 1.0
    %v315 = vmul.f32 %v314, %v188
    %v316 = vand.u32 2147483647, %v188
    %vm317 = vcmp.lt.f32.partialorder %v316, 0.0004427343
    %v318 = vsel %vm317, %v315, %v312
    %v319 = vadd.f32 %v190, 1.0
    %v320 = vlog2.pop %v319
    %v321 = vmul.f32 %v320, 0.6931472
    %v322 = vmul.f32 -0.5, %v190
    %v323 = vadd.f32 %v322, 1.0
    %v324 = vmul.f32 %v323, %v190
    %v325 = vand.u32 2147483647, %v190
    %vm326 = vcmp.lt.f32.partialorder %v325, 0.0004427343
    %v327 = vsel %vm326, %v324, %v321
    %v328 = vadd.f32 %v192, 1.0
    %v329 = vlog2.pop %v328
    %v330 = vmul.f32 %v329, 0.6931472
    %v331 = vmul.f32 -0.5, %v192
    %v332 = vadd.f32 %v331, 1.0
    %v333 = vmul.f32 %v332, %v192
    %v334 = vand.u32 2147483647, %v192
    %vm335 = vcmp.lt.f32.partialorder %v334, 0.0004427343
    %v336 = vsel %vm335, %v333, %v330
    %v337 = vadd.f32 %v113, %v201
    %v338 = vadd.f32 %v114, %v210
    %v339 = vadd.f32 %v115, %v219
    %v340 = vadd.f32 %v116, %v228
    %v341 = vadd.f32 %v117, %v237
    %v342 = vadd.f32 %v118, %v246
    %v343 = vadd.f32 %v119, %v255
    %v344 = vadd.f32 %v120, %v264
    %v345 = vadd.f32 %v121, %v273
    %v346 = vadd.f32 %v122, %v282
    %v347 = vadd.f32 %v123, %v291
    %v348 = vadd.f32 %v124, %v300
    %v349 = vadd.f32 %v125, %v309
    %v350 = vadd.f32 %v126, %v318
    %v351 = vadd.f32 %v127, %v327
    %v352 = vadd.f32 %v128, %v336
    %v353 = vmul.f32 %v337, %v97
    %v354 = vmul.f32 %v338, %v98
    %v355 = vmul.f32 %v339, %v99
    %v356 = vmul.f32 %v340, %v100
    %v357 = vmul.f32 %v341, %v101
    %v358 = vmul.f32 %v342, %v102
    %v359 = vmul.f32 %v343, %v103
    %v360 = vmul.f32 %v344, %v104
    %v361 = vmul.f32 %v345, %v105
    %v362 = vmul.f32 %v346, %v106
    %v363 = vmul.f32 %v347, %v107
    %v364 = vmul.f32 %v348, %v108
    %v365 = vmul.f32 %v349, %v109
    %v366 = vmul.f32 %v350, %v110
    %v367 = vmul.f32 %v351, %v111
    %v368 = vmul.f32 %v352, %v112
    %v369 = vadd.f32 %v63, %v353
    %v370 = vadd.f32 %v64, %v354
    %v371 = vadd.f32 %v65, %v355
    %v372 = vadd.f32 %v66, %v356
    %v373 = vadd.f32 %v67, %v357
    %v374 = vadd.f32 %v68, %v358
    %v375 = vadd.f32 %v69, %v359
    %v376 = vadd.f32 %v70, %v360
    %v377 = vadd.f32 %v71, %v361
    %v378 = vadd.f32 %v72, %v362
    %v379 = vadd.f32 %v73, %v363
    %v380 = vadd.f32 %v74, %v364
    %v381 = vadd.f32 %v75, %v365
    %v382 = vadd.f32 %v76, %v366
    %v383 = vadd.f32 %v77, %v367
    %v384 = vadd.f32 %v78, %v368
    %v385 = vld [vmem:[#allocation2] sm:$0xff]
    %v386 = vld [vmem:[#allocation3] sm:$0xff]
    %387 = vmatpush.msra.mxu0 %v384
    %388 = vmatpush.msra.mxu0 %v383
    %389 = vmatpush.msra.mxu0 %v382
    %390 = vmatpush.msra.mxu0 %v381
    %391 = vmatpush.msra.mxu0 %v380
    %392 = vmatpush.msra.mxu0 %v379
    %393 = vmatpush.msra.mxu0 %v378
    %394 = vmatpush.msra.mxu0 %v377
    %395 = vmatpush.msra.mxu0 %v376
    %396 = vmatpush.msra.mxu0 %v375
    %397 = vmatpush.msra.mxu0 %v374
    %398 = vmatpush.msra.mxu0 %v373
    %399 = vmatpush.msra.mxu0 %v372
    %400 = vmatpush.msra.mxu0 %v371
    %401 = vmatpush.msra.mxu0 %v370
    %402 = vmatpush.msra.mxu0 %v369
    %403 = vmatmul.f32.gmra.mxu0 %v386
    %v404 = vpop.f32.mrf.mxu0
    %v405 = vadd.f32 0.0, %v404
    %406 = vdwg.mxu0
    %v407 = vadd.f32 %v385, %v405
    %408 = vst [vmem:[#allocation2] sm:$0xff] %v407
    // Predicated region
    $region30: #{tpu_custom_call.1} parent=1 // pred_check
      %p409 = pneg %p58
    $region31: #{tpu_custom_call.1} parent=1 // pred_check_branch
      %411 = sbr.rel (%p409) target = $region33
    $region32: #{tpu_custom_call.1} parent=1 // pred_region
      %v412 = vld [vmem:[#allocation8] sm:$0xff]
      %v413 = vmax.f32 %v412, 0.0
      %v414 = vand.u32 2147483647, %v412
      %v415 = vsub.f32 0.0, %v414
      %v416 = vmul.f32 %v415, 1.442695
      %v417 = vpow.pop %v416
      %v418 = vadd.f32 %v417, 1.0
      %v419 = vlog2.pop %v418
      %v420 = vmul.f32 %v419, 0.6931472
      %v421 = vmul.f32 -0.5, %v417
      %v422 = vadd.f32 %v421, 1.0
      %v423 = vmul.f32 %v422, %v417
      %v424 = vand.u32 2147483647, %v417
      %vm425 = vcmp.lt.f32.partialorder %v424, 0.0004427343
      %v426 = vsel %vm425, %v423, %v420
      %v427 = vadd.f32 %v413, %v426
      %v429 = vrot.slane %v412, 1
      %v431 = vmul.f32 %v427, %v429
      %v433 = vrot.slane %v431, 1
      %v435 = vadd.f32 %v412, %v433
      %v436 = vld [vmem:[#allocation2] sm:$0xff]
      %v437 = vperm.slane %v435, 0
      %v438 = vadd.f32 %v436, %v437
      %439 = vst [vmem:[#allocation9] sm:$0xff] %v438
    $region33: #{tpu_custom_call.1} parent=1 // pred_fallthru
      _
    // Predicated region
    $region34: #{tpu_custom_call.1} parent=1 // pred_check
      _
    $region35: #{tpu_custom_call.1} parent=1 // pred_check_branch
      %441 = sbr.rel (0) target = $region37
    $region36: #{tpu_custom_call.1} parent=1 // pred_region
      %443 = vsyncadd [#allocation5], 0
      %s445 = sshll.u32 [#allocation9], 4
      %s446 = int_to_ptr.vmem [resolvable:$true] %s445
      %s447 = sshll.u32 %s3, 4
      %s448 = int_to_ptr.hbm [resolvable:$true] %s447
      %450 = dma.vmem_to_hbm [thread:$0]  %s446, 128, %s448, [#allocation5]
    $region37: #{tpu_custom_call.1} parent=1 // pred_fallthru
      _
    // Predicated region
    $region38: #{tpu_custom_call.1} parent=1 // pred_check
      _
    $region39: #{tpu_custom_call.1} parent=1 // pred_check_branch
      %452 = sbr.rel (0) target = $region41
    $region40: #{tpu_custom_call.1} parent=1 // pred_region
      %454 = dma.done [#allocation5], 128
    $region41: #{tpu_custom_call.1} parent=1 // pred_fallthru
      _
    %455 = vsyncpa [#allocation4], 1
    %456 = vsyncpa [#allocation7], 1
    %457 = vsyncpa [#allocation5], 1

</llo_original>
